<compile_context>
chip_gen: v7x
topology: tpu7x:2x2x1
jax: 0.10.0
libtpu: 0.0.40
codegen_flags: <defaults>
</compile_context>

<pallas_src>
import jax
import jax.numpy as jnp
from jax import lax
from jax.experimental import pallas as pl
from jax.experimental.pallas import tpu as pltpu


def basic_block_kernel(x_ref, scale_ref, shift_ref, b_ref, out_ref):
    """Per-block (Nb images) BN -> ReLU -> 3x3 conv as one fused MXU matmul.

    x_ref:     (Nb, H, W*Cin)   f32   lane-dense activations (w-major, c-minor)
    scale_ref: (1, W*Cin)       f32   folded BN scale, tiled per lane
    shift_ref: (1, W*Cin)       f32   folded BN shift, tiled per lane
    b_ref:     (3*W*Cin, W*Cout) bf16 fused banded conv weights (dy-major along K)
    out_ref:   (Nb, H, W*Cout)  f32   conv output, lane-dense
    """
    Nb, H, WCin = x_ref.shape
    WCout = out_ref.shape[2]
    M = Nb * H

    # Flatten the batch of images into one (M, W*Cin) slab (minor dim untouched -> free).
    x = x_ref[...].reshape(M, WCin)

    # BatchNorm (pre-folded affine) + ReLU on the VPU, in f32.
    xn = jnp.maximum(x * scale_ref[...] + shift_ref[...], 0.0)            # (M, WCin)

    # Row index within each image, for masking the H border of every image in the slab.
    r = lax.broadcasted_iota(jnp.int32, (M, 1), 0) % H

    # Vertical taps via in-register rotate (XLU slot) + border mask.  Positive static
    # shifts only (M-1 == circular shift by -1); the mask also kills the wrap-around row,
    # so rows never leak across image boundaries within the batched slab.
    x_up = jnp.where(r == 0, 0.0, pltpu.roll(xn, 1, 0)).astype(jnp.bfloat16)
    x_ct = xn.astype(jnp.bfloat16)
    x_dn = jnp.where(r == H - 1, 0.0, pltpu.roll(xn, M - 1, 0)).astype(jnp.bfloat16)

    # Single fused MXU pass: K = 3*W*Cin, bf16 in, f32 accumulate.  The band matrix already
    # encodes the horizontal taps and the width zero-padding.
    xk = jnp.concatenate([x_up, x_ct, x_dn], axis=1)                      # (M, 3*WCin)
    acc = jnp.dot(xk, b_ref[...], preferred_element_type=jnp.float32)     # (M, WCout)

    out_ref[...] = acc.reshape(Nb, H, WCout)


def _pick_block_batch(N, target=16):
    """Largest divisor of N that is <= target, preferring >= 2 grid steps (v7x megacore)."""
    candidates = [d for d in range(1, N + 1) if N % d == 0 and d <= target]
    nb = max(candidates) if candidates else 1
    if N // nb < 2:
        smaller = [d for d in candidates if N // d >= 2]
        if smaller:
            nb = max(smaller)
    return nb


def basic_block_forward(x_nchw, gamma, beta, conv_w, eps=1e-5, nb=None):
    """x_nchw:(N,Cin,H,W) f32; gamma/beta:(Cin,); conv_w:(Cout,Cin,3,3).
    Returns (N, Cout+Cin, H, W) == torch.cat([conv(relu(bn(x))), x], dim=1)."""
    N, Cin, H, W = x_nchw.shape
    Cout = conv_w.shape[0]
    WCin, WCout = W * Cin, W * Cout

    x = x_nchw.astype(jnp.float32)

    # Training-mode BatchNorm statistics (biased variance), single pass (E[x], E[x^2]),
    # folded into per-channel scale/shift.
    mean = jnp.mean(x, axis=(0, 2, 3))
    var = jnp.mean(jnp.square(x), axis=(0, 2, 3)) - jnp.square(mean)
    inv_std = lax.rsqrt(var + eps)
    scale_c = gamma.astype(jnp.float32) * inv_std
    shift_c = beta.astype(jnp.float32) - mean * scale_c
    # Per-lane (w-major, c-minor) scale/shift vectors for the flattened layout.
    scale = jnp.tile(scale_c, W).reshape(1, WCin)
    shift = jnp.tile(shift_c, W).reshape(1, WCin)

    # NCHW -> (N, H, W*Cin): channels on the minor dim, flattened with W for lane density.
    x_flat = jnp.transpose(x, (0, 2, 3, 1)).reshape(N, H, WCin)

    # Banded conv weights, fused along dy into a single (3*W*Cin, W*Cout) matrix:
    #   B[dy*WCin + w'*Cin + ci, w*Cout + co] = K[co, ci, dy, dx]  with  w' = w + dx - 1
    # (entries with w' outside [0,W) are absent -> width zero-padding is built in).
    Kt = jnp.transpose(conv_w.astype(jnp.float32), (2, 3, 1, 0))            # (dy, dx, Cin, Cout)
    E = jnp.stack([jnp.eye(W, W, k=1 - dx, dtype=jnp.float32) for dx in range(3)])  # (dx, w', w)
    bands = jnp.einsum('xab,yxcd->yacbd', E, Kt)                            # (dy, w', ci, w, co)
    bands = bands.reshape(3 * WCin, WCout).astype(jnp.bfloat16)

    # Block-batch size: Nb images per grid step (amortize per-step overhead, fill the MXU),
    # keeping >= 2 grid steps when possible so both v7x TensorCores get work.
    nb = _pick_block_batch(N) if nb is None else nb
    grid_n = N // nb
    m = nb * H

    # VMEM budget derived from the actual working set (double-buffered blocks + weights
    # + in-kernel temporaries), with headroom; stays far below v7x's 64 MiB physical VMEM.
    block_in = m * WCin * 4
    block_out = m * WCout * 4
    weights = 3 * WCin * WCout * 2 + 2 * WCin * 4
    temps = m * (3 * WCin) * (4 + 2) + m * WCout * 4
    vmem_limit = int(min(max(2 * (block_in + block_out + weights) + temps + (2 << 20),
                             4 << 20), 32 << 20))

    conv_flat = pl.pallas_call(
        basic_block_kernel,
        out_shape=jax.ShapeDtypeStruct((N, H, WCout), jnp.float32),
        grid_spec=pltpu.PrefetchScalarGridSpec(
            num_scalar_prefetch=0,
            grid=(grid_n,),                              # pipelined over image blocks
            in_specs=[
                pl.BlockSpec((nb, H, WCin), lambda n: (n, 0, 0)),
                pl.BlockSpec((1, WCin), lambda n: (0, 0)),
                pl.BlockSpec((1, WCin), lambda n: (0, 0)),
                pl.BlockSpec((3 * WCin, WCout), lambda n: (0, 0)),
            ],
            out_specs=pl.BlockSpec((nb, H, WCout), lambda n: (n, 0, 0)),
        ),
        compiler_params=pltpu.CompilerParams(
            dimension_semantics=("parallel",),           # megacore on v7x when grid_n >= 2
            vmem_limit_bytes=vmem_limit,
        ),
    )(x_flat, scale, shift, bands)

    # Back to NCHW and concat with the ORIGINAL x (exact, matching torch.cat([out, x], 1)).
    conv_nchw = jnp.transpose(conv_flat.reshape(N, H, W, Cout), (0, 3, 1, 2))
    return jnp.concatenate([conv_nchw, x], axis=1)


def _reference(x_nchw, gamma, beta, conv_w, eps=1e-5):
    """Pure-JAX f32 reference for validation."""
    x = x_nchw.astype(jnp.float32)
    mean = jnp.mean(x, axis=(0, 2, 3), keepdims=True)
    var = jnp.mean((x - mean) ** 2, axis=(0, 2, 3), keepdims=True)
    xn = (x - mean) / jnp.sqrt(var + eps) * gamma.reshape(1, -1, 1, 1) + beta.reshape(1, -1, 1, 1)
    xr = jnp.maximum(xn, 0.0)
    out = lax.conv_general_dilated(
        xr, conv_w.astype(jnp.float32), window_strides=(1, 1), padding=((1, 1), (1, 1)),
        dimension_numbers=("NCHW", "OIHW", "NCHW"))
    return jnp.concatenate([out, x], axis=1)


if __name__ == "__main__":
    N, Cin, H, W = 2, 4, 16, 16        # batch=2, in_channels=4, spatial=16
    growth_rate = 8                    # W*Cout = 128 -> fully lane-dense output

    key = jax.random.PRNGKey(0)
    kx, kg, kb, kw = jax.random.split(key, 4)
    x = jax.random.normal(kx, (N, Cin, H, W), dtype=jnp.float32)
    gamma = jax.random.uniform(kg, (Cin,), minval=0.5, maxval=1.5, dtype=jnp.float32)
    beta = jax.random.uniform(kb, (Cin,), minval=-0.1, maxval=0.1, dtype=jnp.float32)
    conv_w = 0.1 * jax.random.normal(kw, (growth_rate, Cin, 3, 3), dtype=jnp.float32)

    out = jax.block_until_ready(basic_block_forward(x, gamma, beta, conv_w))
    ref = jax.block_until_ready(_reference(x, gamma, beta, conv_w))

    assert out.shape == (N, growth_rate + Cin, H, W), out.shape
    # bf16 MXU inputs (f32 accumulation) -> loosened tolerance vs the pure-f32 reference.
    assert jnp.allclose(out, ref, atol=5e-2, rtol=5e-2), float(jnp.max(jnp.abs(out - ref)))
    # The skip-connection half of the concat must be bit-exact.
    assert jnp.array_equal(out[:, growth_rate:], x)

    print("KERNEL_OK")
</pallas_src>

<mosaic_0001>
module attributes {stable_mosaic.version = 11 : i64} {
  func.func @basic_block_kernel(%arg0: i32, %arg1: memref<1x16x64xf32, #tpu.memory_space<vmem>>, %arg2: memref<1x64xf32, #tpu.memory_space<vmem>>, %arg3: memref<1x64xf32, #tpu.memory_space<vmem>>, %arg4: memref<192x128xbf16, #tpu.memory_space<vmem>>, %arg5: memref<1x16x128xf32, #tpu.memory_space<vmem>>) attributes {dimension_semantics = [#tpu.dimension_semantics<parallel>], iteration_bounds = array<i64: 2>, scalar_prefetch = 0 : i64, scratch_operands = 0 : i64, tpu.core_type = #tpu.core_type<tc>, window_params = [{transform_indices = @transform_0, window_bounds = array<i64: 1, 16, 64>}, {pipeline_mode = #tpu.pipeline_mode<synchronous>, transform_indices = @transform_1, window_bounds = array<i64: 1, 64>}, {pipeline_mode = #tpu.pipeline_mode<synchronous>, transform_indices = @transform_2, window_bounds = array<i64: 1, 64>}, {pipeline_mode = #tpu.pipeline_mode<synchronous>, transform_indices = @transform_3, window_bounds = array<i64: 192, 128>}, {transform_indices = @transform_4, window_bounds = array<i64: 1, 16, 128>}]} {
    %c0 = arith.constant 0 : index
    %c0_0 = arith.constant 0 : index
    %c0_1 = arith.constant 0 : index
    %0 = vector.load %arg1[%c0, %c0_0, %c0_1] : memref<1x16x64xf32, #tpu.memory_space<vmem>>, vector<1x16x64xf32>
    %1 = vector.shape_cast %0 : vector<1x16x64xf32> to vector<16x64xf32>
    %c0_2 = arith.constant 0 : index
    %c0_3 = arith.constant 0 : index
    %2 = vector.load %arg2[%c0_2, %c0_3] : memref<1x64xf32, #tpu.memory_space<vmem>>, vector<1x64xf32>
    %3 = vector.broadcast %2 : vector<1x64xf32> to vector<16x64xf32>
    %4 = arith.mulf %1, %3 : vector<16x64xf32>
    %c0_4 = arith.constant 0 : index
    %c0_5 = arith.constant 0 : index
    %5 = vector.load %arg3[%c0_4, %c0_5] : memref<1x64xf32, #tpu.memory_space<vmem>>, vector<1x64xf32>
    %6 = vector.broadcast %5 : vector<1x64xf32> to vector<16x64xf32>
    %7 = arith.addf %4, %6 : vector<16x64xf32>
    %cst = arith.constant 0.000000e+00 : f32
    %8 = vector.broadcast %cst : f32 to vector<16x64xf32>
    %9 = arith.maximumf %7, %8 : vector<16x64xf32>
    %10 = tpu.iota {dimensions = array<i32: 0>} : vector<16x1xi32>
    %c16_i32 = arith.constant 16 : i32
    %c0_i32 = arith.constant 0 : i32
    %11 = arith.cmpi eq, %c16_i32, %c0_i32 : i32
    %c1_i32 = arith.constant 1 : i32
    %12 = arith.select %11, %c1_i32, %c16_i32 : i32
    %13 = vector.broadcast %12 : i32 to vector<16x1xi32>
    %14 = arith.remsi %10, %13 : vector<16x1xi32>
    %c0_i32_6 = arith.constant 0 : i32
    %15 = vector.broadcast %c0_i32_6 : i32 to vector<16x1xi32>
    %16 = arith.cmpi ne, %14, %15 : vector<16x1xi32>
    %c0_i32_7 = arith.constant 0 : i32
    %17 = vector.broadcast %c0_i32_7 : i32 to vector<16x1xi32>
    %18 = arith.cmpi slt, %14, %17 : vector<16x1xi32>
    %c0_i32_8 = arith.constant 0 : i32
    %19 = arith.cmpi slt, %12, %c0_i32_8 : i32
    %20 = vector.broadcast %19 : i1 to vector<16x1xi1>
    %21 = vector.broadcast %20 : vector<16x1xi1> to vector<16x1xi1>
    %22 = arith.xori %18, %21 : vector<16x1xi1>
    %23 = arith.andi %22, %16 : vector<16x1xi1>
    %24 = vector.broadcast %12 : i32 to vector<16x1xi32>
    %25 = arith.addi %14, %24 : vector<16x1xi32>
    %26 = arith.select %23, %25, %14 : vector<16x1xi1>, vector<16x1xi32>
    %c0_i32_9 = arith.constant 0 : i32
    %27 = vector.broadcast %c0_i32_9 : i32 to vector<16x1xi32>
    %28 = arith.cmpi eq, %26, %27 : vector<16x1xi32>
    %c1_i32_10 = arith.constant 1 : i32
    %29 = tpu.dynamic_rotate %9 by %c1_i32_10 dim 0 : vector<16x64xf32>, i32 -> vector<16x64xf32>
    %cst_11 = arith.constant 0.000000e+00 : f32
    %30 = vector.shape_cast %28 : vector<16x1xi1> to vector<16x1xi1>
    %31 = vector.broadcast %30 : vector<16x1xi1> to vector<16x64xi1>
    %32 = vector.broadcast %cst_11 : f32 to vector<16x64xf32>
    %33 = arith.select %31, %32, %29 : vector<16x64xi1>, vector<16x64xf32>
    %34 = arith.truncf %33 : vector<16x64xf32> to vector<16x64xbf16>
    %35 = arith.truncf %9 : vector<16x64xf32> to vector<16x64xbf16>
    %c15_i32 = arith.constant 15 : i32
    %36 = vector.broadcast %c15_i32 : i32 to vector<16x1xi32>
    %37 = arith.cmpi eq, %26, %36 : vector<16x1xi32>
    %c15_i32_12 = arith.constant 15 : i32
    %38 = tpu.dynamic_rotate %9 by %c15_i32_12 dim 0 : vector<16x64xf32>, i32 -> vector<16x64xf32>
    %cst_13 = arith.constant 0.000000e+00 : f32
    %39 = vector.shape_cast %37 : vector<16x1xi1> to vector<16x1xi1>
    %40 = vector.broadcast %39 : vector<16x1xi1> to vector<16x64xi1>
    %41 = vector.broadcast %cst_13 : f32 to vector<16x64xf32>
    %42 = arith.select %40, %41, %38 : vector<16x64xi1>, vector<16x64xf32>
    %43 = arith.truncf %42 : vector<16x64xf32> to vector<16x64xbf16>
    %44 = tpu.concatenate %34, %35, %43 in 1 : vector<16x64xbf16>, vector<16x64xbf16>, vector<16x64xbf16> -> vector<16x192xbf16>
    %c0_14 = arith.constant 0 : index
    %c0_15 = arith.constant 0 : index
    %45 = vector.load %arg4[%c0_14, %c0_15] : memref<192x128xbf16, #tpu.memory_space<vmem>>, vector<192x128xbf16>
    %cst_16 = arith.constant dense<0.000000e+00> : vector<16x128xf32>
    %46 = tpu.matmul %44, %45, %cst_16 {dimension_numbers = #tpu.dot_dimension_numbers<[1], [0], [0], [1], [0, 0, 1, 1], [], []>} : vector<16x192xbf16>, vector<192x128xbf16>, vector<16x128xf32> -> vector<16x128xf32>
    %47 = vector.shape_cast %46 : vector<16x128xf32> to vector<1x16x128xf32>
    %c0_17 = arith.constant 0 : index
    %c0_18 = arith.constant 0 : index
    %c0_19 = arith.constant 0 : index
    %48 = vector.load %arg5[%c0_17, %c0_18, %c0_19] : memref<1x16x128xf32, #tpu.memory_space<vmem>>, vector<1x16x128xf32>
    tpu.vector_store %arg5[%c0_17, %c0_18, %c0_19], %47 {strides = array<i32>} : memref<1x16x128xf32, #tpu.memory_space<vmem>>, vector<1x16x128xf32>,
    return
  }
  func.func @transform_0(%arg0: i32) -> (i32, i32, i32) {
    %c0_i32 = arith.constant 0 : i32
    %c0_i32_0 = arith.constant 0 : i32
    %c0_i32_1 = arith.constant 0 : i32
    return %arg0, %c0_i32, %c0_i32_0 : i32, i32, i32
  }
  func.func @transform_1(%arg0: i32) -> (i32, i32) {
    %c0_i32 = arith.constant 0 : i32
    %c0_i32_0 = arith.constant 0 : i32
    %c0_i32_1 = arith.constant 0 : i32
    return %c0_i32, %c0_i32_0 : i32, i32
  }
  func.func @transform_2(%arg0: i32) -> (i32, i32) {
    %c0_i32 = arith.constant 0 : i32
    %c0_i32_0 = arith.constant 0 : i32
    %c0_i32_1 = arith.constant 0 : i32
    return %c0_i32, %c0_i32_0 : i32, i32
  }
  func.func @transform_3(%arg0: i32) -> (i32, i32) {
    %c0_i32 = arith.constant 0 : i32
    %c0_i32_0 = arith.constant 0 : i32
    %c0_i32_1 = arith.constant 0 : i32
    return %c0_i32, %c0_i32_0 : i32, i32
  }
  func.func @transform_4(%arg0: i32) -> (i32, i32, i32) {
    %c0_i32 = arith.constant 0 : i32
    %c0_i32_0 = arith.constant 0 : i32
    %c0_i32_1 = arith.constant 0 : i32
    return %arg0, %c0_i32, %c0_i32_0 : i32, i32, i32
  }
}

</mosaic_0001>

<llo_original>
// kernel: tpu_custom_call.1
$region0: #{tpu_custom_call.1}
  #allocation0 [shape = 'u32[]', space=smem, size = 0x4, offset = 0x4, fixed_abs, tag = 'smem constant byte address 0x4 - core index']
  #allocation1 [shape = 'u32[144,128]{1,0:T(1,128)}', space=vmem, size = 0x12000, scoped, tag = 'internal scratch']
  %s0 = inlined_call_operand.hbm [shape: f32[2,16,64], index: 0, kind: input, shape index: {}]
  %s1 = inlined_call_operand.vmem [shape: f32[1,64], index: 1, kind: input, shape index: {}]
  %s2 = inlined_call_operand.vmem [shape: f32[1,64], index: 2, kind: input, shape index: {}]
  %s3 = inlined_call_operand.hbm [shape: bf16[192,128], index: 3, kind: input, shape index: {}]
  %s4 = inlined_call_operand.hbm [shape: f32[2,16,128], index: 4, kind: output, shape index: {}]
  %s5 = sld [smem:[#allocation0]]
  $region57: #{tpu_custom_call.1} parent=0
    _
  %s7 = ssub.s32 1, %s5
  %s8 = scalar_select 0, %s7, %s5
  $region1: #{tpu_custom_call.1} parent=0
    #allocation2 [shape = 'u8[16384]{0}', space=vmem, size = 0x4000, scoped, tag = 'input window, operand 0']
    #allocation3 [shape = 's32[2]{0}', space=sflag, size = 0x8, scoped, tag = 'scoped memory for tpu_custom_call.1']
    #allocation4 [shape = 's32[2]{0}', space=sflag, size = 0x8, scoped, tag = 'scoped memory for tpu_custom_call.1']
    #allocation5 [shape = 'u8[49152]{0}', space=vmem, size = 0xc000, scoped, tag = 'input window, operand 3, single buffered']
    #allocation6 [shape = 's32[1]{0}', space=sflag, size = 0x4, scoped, tag = 'scoped memory for tpu_custom_call.1']
    #allocation7 [shape = 'u8[16384]{0}', space=vmem, size = 0x4000, scoped, tag = 'output window, operand 0']
    %9 = vsyncpa [#allocation3], 0
    %s10 = scalar_lea.sflag [#allocation3], 1
    %11 = vsyncpa %s10, 0
    %12 = vsyncpa [#allocation6], 0
    %13 = vsyncpa [#allocation4], 0
    %s14 = scalar_lea.sflag [#allocation4], 1
    %15 = vsyncpa %s14, 0
    loop: start=0, step=1, limit=4
    $region2: #{tpu_custom_call.1} parent=1 // loop_pre_header
      _
    $region3: #{tpu_custom_call.1} parent=1 // loop_header
      %s17 = sphi 0, %s21
      %p18 = scmp.ge.s32.totalorder %s17, 4
      %s27 = sphi 0, %s29
      %s30 = sphi 0, %s27
      %s31 = sphi 0, %s30
      %s47 = sphi 0, %s31
      %s51 = sphi 0, %s51
      %s53 = sphi 0, %s51
      %s54 = sphi 0, %s53
      %s68 = sphi 0, %s54
      %s72 = sphi 0, %s72
      %s74 = sphi 0, %s72
      %s75 = sphi 0, %s74
      %s89 = sphi 0, %s75
      %s93 = sphi 0, %s93
      %s95 = sphi 0, %s93
      %s96 = sphi 0, %s95
      %s110 = sphi 0, %s96
      %s116 = sphi 0, %s118
      %s119 = sphi 0, %s116
      %s120 = sphi 0, %s119
      %s136 = sphi 0, %s120
    $region4: #{tpu_custom_call.1} parent=1 // loop_header_branch
      %20 = sbr.rel (%p18) target = $region8
    $region5: #{tpu_custom_call.1} parent=1 // loop_body
      %s22 = ssub.s32 %s17, 1
      %s23 = ssub.s32 %s17, 2
      %s24 = sadd.s32 %s17, 1
      %s25 = ssub.s32 %s17, %s24
      %p26 = scmp.eq.s32.totalorder %s25, 0
      %s28 = sadd.s32 %s27, 1
      %s29 = scalar_select %p26, %s27, %s28
      %p32 = pneg %p26
      %p33 = scmp.eq.s32.totalorder %s17, 1
      %p34 = por %p32, %p33
      %p35 = scmp.ne.s32.totalorder %s27, %s30
      %p36 = scmp.eq.s32.totalorder %s17, 0
      %p37 = por %p35, %p36
      %p38 = scmp.ne.s32.totalorder %s27, %s30
      %p39 = scmp.eq.s32.totalorder %s22, 1
      %p40 = por %p38, %p39
      %p41 = scmp.ne.s32.totalorder %s30, %s31
      %p42 = scmp.eq.s32.totalorder %s22, 0
      %p43 = por %p41, %p42
      %p44 = scmp.ne.s32.totalorder %s30, %s31
      %p45 = scmp.eq.s32.totalorder %s23, 1
      %p46 = por %p44, %p45
      %p48 = scmp.ne.s32.totalorder %s31, %s47
      %p49 = scmp.eq.s32.totalorder %s23, 0
      %p50 = por %p48, %p49
      %s52 = sadd.s32 %s51, 1
      %p55 = scmp.eq.s32.totalorder %s17, 1
      %p56 = scmp.ne.s32.totalorder %s51, %s53
      %p57 = scmp.eq.s32.totalorder %s17, 0
      %p58 = por %p56, %p57
      %p59 = scmp.ne.s32.totalorder %s51, %s53
      %p60 = scmp.eq.s32.totalorder %s22, 1
      %p61 = por %p59, %p60
      %p62 = scmp.ne.s32.totalorder %s53, %s54
      %p63 = scmp.eq.s32.totalorder %s22, 0
      %p64 = por %p62, %p63
      %p65 = scmp.ne.s32.totalorder %s53, %s54
      %p66 = scmp.eq.s32.totalorder %s23, 1
      %p67 = por %p65, %p66
      %p69 = scmp.ne.s32.totalorder %s54, %s68
      %p70 = scmp.eq.s32.totalorder %s23, 0
      %p71 = por %p69, %p70
      %s73 = sadd.s32 %s72, 1
      %p76 = scmp.eq.s32.totalorder %s17, 1
      %p77 = scmp.ne.s32.totalorder %s72, %s74
      %p78 = scmp.eq.s32.totalorder %s17, 0
      %p79 = por %p77, %p78
      %p80 = scmp.ne.s32.totalorder %s72, %s74
      %p81 = scmp.eq.s32.totalorder %s22, 1
      %p82 = por %p80, %p81
      %p83 = scmp.ne.s32.totalorder %s74, %s75
      %p84 = scmp.eq.s32.totalorder %s22, 0
      %p85 = por %p83, %p84
      %p86 = scmp.ne.s32.totalorder %s74, %s75
      %p87 = scmp.eq.s32.totalorder %s23, 1
      %p88 = por %p86, %p87
      %p90 = scmp.ne.s32.totalorder %s75, %s89
      %p91 = scmp.eq.s32.totalorder %s23, 0
      %p92 = por %p90, %p91
      %s94 = sadd.s32 %s93, 1
      %p97 = scmp.eq.s32.totalorder %s17, 1
      %p98 = scmp.ne.s32.totalorder %s93, %s95
      %p99 = scmp.eq.s32.totalorder %s17, 0
      %p100 = por %p98, %p99
      %p101 = scmp.ne.s32.totalorder %s93, %s95
      %p102 = scmp.eq.s32.totalorder %s22, 1
      %p103 = por %p101, %p102
      %p104 = scmp.ne.s32.totalorder %s95, %s96
      %p105 = scmp.eq.s32.totalorder %s22, 0
      %p106 = por %p104, %p105
      %p107 = scmp.ne.s32.totalorder %s95, %s96
      %p108 = scmp.eq.s32.totalorder %s23, 1
      %p109 = por %p107, %p108
      %p111 = scmp.ne.s32.totalorder %s96, %s110
      %p112 = scmp.eq.s32.totalorder %s23, 0
      %p113 = por %p111, %p112
      %s114 = ssub.s32 %s17, %s24
      %p115 = scmp.eq.s32.totalorder %s114, 0
      %s117 = sadd.s32 %s116, 1
      %s118 = scalar_select %p115, %s116, %s117
      %p121 = pneg %p115
      %p122 = scmp.eq.s32.totalorder %s17, 1
      %p123 = por %p121, %p122
      %p124 = scmp.ne.s32.totalorder %s116, %s119
      %p125 = scmp.eq.s32.totalorder %s17, 0
      %p126 = por %p124, %p125
      %p127 = scmp.ne.s32.totalorder %s116, %s119
      %p128 = scmp.eq.s32.totalorder %s22, 1
      %p129 = por %p127, %p128
      %p130 = scmp.ne.s32.totalorder %s119, %s120
      %p131 = scmp.eq.s32.totalorder %s22, 0
      %p132 = por %p130, %p131
      %p133 = scmp.ne.s32.totalorder %s119, %s120
      %p134 = scmp.eq.s32.totalorder %s23, 1
      %p135 = por %p133, %p134
      %p137 = scmp.ne.s32.totalorder %s120, %s136
      %p138 = scmp.eq.s32.totalorder %s23, 0
      %p139 = por %p137, %p138
      %p140 = scmp.le.s32.totalorder 1, %s17
      %p141 = scmp.lt.s32.totalorder %s17, 3
      %p142 = pnand %p140, %p141
      %p143 = pneg %p142
      // Predicated region
      $region9: #{tpu_custom_call.1} parent=5 // pred_check
        _
      $region10: #{tpu_custom_call.1} parent=5 // pred_check_branch
        %145 = sbr.rel (%p142) target = $region12
      $region11: #{tpu_custom_call.1} parent=5 // pred_region
        %s146 = ssub.s32 %s17, 1
        // Predicated region
        $region13: #{tpu_custom_call.1} parent=11 // pred_check
          %p147 = pneg %p64
        $region14: #{tpu_custom_call.1} parent=11 // pred_check_branch
          %149 = sbr.rel (%p147) target = $region16
        $region15: #{tpu_custom_call.1} parent=11 // pred_region
          _
        $region16: #{tpu_custom_call.1} parent=11 // pred_fallthru
          _
        // Predicated region
        $region17: #{tpu_custom_call.1} parent=11 // pred_check
          %p150 = pneg %p85
        $region18: #{tpu_custom_call.1} parent=11 // pred_check_branch
          %152 = sbr.rel (%p150) target = $region20
        $region19: #{tpu_custom_call.1} parent=11 // pred_region
          _
        $region20: #{tpu_custom_call.1} parent=11 // pred_fallthru
          _
        // Predicated region
        $region21: #{tpu_custom_call.1} parent=11 // pred_check
          %p153 = pneg %p106
        $region22: #{tpu_custom_call.1} parent=11 // pred_check_branch
          %155 = sbr.rel (%p153) target = $region24
        $region23: #{tpu_custom_call.1} parent=11 // pred_region
          %s157 = ssub.s32 1536, 1536
          %158 = vsyncadd [#allocation6], %s157
          %s159 = sshll.u32 [#allocation5], 4
          %s160 = int_to_ptr.vmem [resolvable:$true] %s159
          %165 = dma.hbm_to_vmem [thread:$0]  %s3, 1536, %s160, [#allocation6], 64, 64, 4
        $region24: #{tpu_custom_call.1} parent=11 // pred_fallthru
          _
      $region12: #{tpu_custom_call.1} parent=5 // pred_fallthru
        _
      %p166 = scmp.lt.s32.totalorder %s17, 2
      // Predicated region
      $region25: #{tpu_custom_call.1} parent=5 // pred_check
        %p167 = pneg %p166
      $region26: #{tpu_custom_call.1} parent=5 // pred_check_branch
        %169 = sbr.rel (%p167) target = $region28
      $region27: #{tpu_custom_call.1} parent=5 // pred_region
        // Predicated region
        $region29: #{tpu_custom_call.1} parent=27 // pred_check
          %p170 = pneg %p37
        $region30: #{tpu_custom_call.1} parent=27 // pred_check_branch
          %172 = sbr.rel (%p170) target = $region32
        $region31: #{tpu_custom_call.1} parent=27 // pred_region
          %s173 = sand.u32 %s27, 1
          %s174 = scalar_lea.sflag [#allocation3], %s173
          %s175 = sand.u32 %s27, 1
          %s176 = smul.addr %s175, 16
          %s177 = scalar_lea.vmem [#allocation2], %s176
          %s179 = ssub.s32 256, 256
          %180 = vsyncadd %s174, %s179
          %s181 = smul.addr %s17, 2
          %s182 = smul.addr %s181, 128
          %s183 = scalar_lea.hbm %s0, %s182
          %s184 = sshll.u32 %s177, 4
          %s185 = int_to_ptr.vmem [resolvable:$true] %s184
          %190 = dma.hbm_to_vmem [thread:$0]  %s183, 256, %s185, %s174, 128, 128, 8
        $region32: #{tpu_custom_call.1} parent=27 // pred_fallthru
          _
      $region28: #{tpu_custom_call.1} parent=5 // pred_fallthru
        _
      %p191 = scmp.le.s32.totalorder 1, %s17
      %p192 = scmp.lt.s32.totalorder %s17, 3
      %p193 = pnand %p191, %p192
      %p194 = pneg %p193
      // Predicated region
      $region33: #{tpu_custom_call.1} parent=5 // pred_check
        _
      $region34: #{tpu_custom_call.1} parent=5 // pred_check_branch
        %196 = sbr.rel (%p193) target = $region36
      $region35: #{tpu_custom_call.1} parent=5 // pred_region
        %s197 = ssub.s32 %s17, 1
        %s198 = sand.u32 %s30, 1
        %s199 = scalar_lea.sflag [#allocation3], %s198
        %s200 = sand.u32 %s30, 1
        %s201 = smul.addr %s200, 16
        %s202 = scalar_lea.vmem [#allocation2], %s201
        // Predicated region
        $region37: #{tpu_custom_call.1} parent=35 // pred_check
          %p203 = pneg %p43
        $region38: #{tpu_custom_call.1} parent=35 // pred_check_branch
          %205 = sbr.rel (%p203) target = $region40
        $region39: #{tpu_custom_call.1} parent=35 // pred_region
          %206 = dma.done %s199, 256
        $region40: #{tpu_custom_call.1} parent=35 // pred_fallthru
          _
        // Predicated region
        $region41: #{tpu_custom_call.1} parent=35 // pred_check
          %p207 = pneg %p106
        $region42: #{tpu_custom_call.1} parent=35 // pred_check_branch
          %209 = sbr.rel (%p207) target = $region44
        $region43: #{tpu_custom_call.1} parent=35 // pred_region
          %210 = dma.done [#allocation6], 1536
        $region44: #{tpu_custom_call.1} parent=35 // pred_fallthru
          _
        %s211 = sand.u32 %s30, 1
        %s212 = scalar_lea.sflag [#allocation3], %s211
        %s213 = sand.u32 %s30, 1
        %s214 = smul.addr %s213, 16
        %s215 = scalar_lea.vmem [#allocation2], %s214
        %p216 = pneg %p43
        %p217 = pneg %p40
        %p218 = pneg %p64
        %p219 = pneg %p61
        %p220 = pneg %p85
        %p221 = pneg %p82
        %p222 = pneg %p106
        %p223 = pneg %p103
        %p224 = pneg %p132
        %p225 = pneg %p129
        %s226 = sand.u32 %s119, 1
        %s227 = scalar_lea.sflag [#allocation4], %s226
        %s228 = sand.u32 %s119, 1
        %s229 = smul.addr %s228, 16
        %s230 = scalar_lea.vmem [#allocation7], %s229
        %v232 = vld [vmem:[%s202] sm:$0xff]
        %v233 = vld [vmem:[%s202 + $0x8] sm:$0xff]
        %v234 = vld [vmem:[%s1] sm:$0x1]
        %v236 = vlaneseq
        %v237 = vshrl.u32 %v236, 7
        %v238 = vsub.s32 0, %v237
        %v239 = vrot.slane %v234, %v238
        %v241 = vmul.f32 %v232, %v239
        %v242 = vmul.f32 %v233, %v239
        %v243 = vld [vmem:[%s2] sm:$0x1]
        %v245 = vlaneseq
        %v246 = vshrl.u32 %v245, 7
        %v247 = vsub.s32 0, %v246
        %v248 = vrot.slane %v243, %v247
        %v250 = vadd.f32 %v241, %v248
        %v251 = vadd.f32 %v242, %v248
        %v252 = vmax.f32 %v250, 0.0
        %v253 = vmax.f32 %v251, 0.0
        %v254 = vlaneseq
        %v255 = vshrl.u32 %v254, 7
        %v256 = vadd.s32 %v255, 8
        %vm257 = vcmp.lt.s32.totalorder %v255, 0
        %v258 = vsub.s32 0, %v255
        %v259 = vsel %vm257, %v258, %v255
        %v260 = vshrl.u32 %v259, 4
        %v261 = vand.u32 %v259, 15
        %v262 = vsub.s32 0, %v261
        %v263 = vsel %vm257, %v262, %v261
        %vm264 = vcmp.lt.s32.totalorder %v256, 0
        %v265 = vsub.s32 0, %v256
        %v266 = vsel %vm264, %v265, %v256
        %v267 = vshrl.u32 %v266, 4
        %v268 = vand.u32 %v266, 15
        %v269 = vsub.s32 0, %v268
        %v270 = vsel %vm264, %v269, %v268
        %vm271 = vcmp.ne.s32.totalorder %v263, 0
        %vm272 = vcmp.ne.s32.totalorder %v270, 0
        %vm273 = vcmp.lt.s32.totalorder %v263, 0
        %vm274 = vcmp.lt.s32.totalorder %v270, 0
        %vm275 = vmand %vm273, %vm271
        %vm276 = vmand %vm274, %vm272
        %v277 = vadd.s32 %v263, 16
        %v278 = vadd.s32 %v270, 16
        %v279 = vsel %vm275, %v277, %v263
        %v280 = vsel %vm276, %v278, %v270
        %vm281 = vcmp.eq.s32.totalorder %v279, 0
        %vm282 = vcmp.eq.s32.totalorder %v280, 0
        %v283 = vrot.slane %v252, 7
        %v284 = vrot.slane %v253, 7
        %vm285 = vcmp.lt.s32.totalorder %v255, 1
        %v286 = vsel %vm285, %v283, %v284
        %v287 = vsel %vm285, %v284, %v283
        %v288 = vsel %vm281, 1, 0
        %v289 = vsel %vm282, 1, 0
        %vm290 = vcmp.eq.s32.totalorder %v288, 1
        %vm291 = vcmp.eq.s32.totalorder %v289, 1
        %v292 = vsel %vm290, 0.0, %v287
        %v293 = vsel %vm291, 0.0, %v286
        %v294 = vpack.c.bf16 %v293, %v292
        %v295 = vpack.c.bf16 %v253, %v252
        %vm296 = vcmp.eq.s32.totalorder %v279, 15
        %vm297 = vcmp.eq.s32.totalorder %v280, 15
        %v298 = vrot.slane %v252, 1
        %v299 = vrot.slane %v253, 1
        %vm300 = vcmp.lt.s32.totalorder %v255, 7
        %v301 = vsel %vm300, %v298, %v299
        %v302 = vsel %vm300, %v299, %v298
        %v303 = vsel %vm296, 1, 0
        %v304 = vsel %vm297, 1, 0
        %vm305 = vcmp.eq.s32.totalorder %v303, 1
        %vm306 = vcmp.eq.s32.totalorder %v304, 1
        %v307 = vsel %vm305, 0.0, %v301
        %v308 = vsel %vm306, 0.0, %v302
        %v309 = vpack.c.bf16 %v308, %v307
        %311 = vrot.lane.b32.xlu0 %v295, 64
        %v312 = vpop.permute.xlu0 %311
        %vm313 = vcmask 523264
        %v316 = vsel %vm313, %v294, %v312
        %v318 = vld [vmem:[#allocation5] sm:$0xf]
        %v319 = vld [vmem:[#allocation5 + $0x4] sm:$0xf]
        %v320 = vld [vmem:[#allocation5 + $0x8] sm:$0xf]
        %v321 = vld [vmem:[#allocation5 + $0xc] sm:$0xf]
        %v322 = vld [vmem:[#allocation5 + $0x10] sm:$0xf]
        %v323 = vld [vmem:[#allocation5 + $0x14] sm:$0xf]
        %v324 = vld [vmem:[#allocation5 + $0x18] sm:$0xf]
        %v325 = vld [vmem:[#allocation5 + $0x1c] sm:$0xf]
        %v326 = vld [vmem:[#allocation5 + $0x20] sm:$0xf]
        %v327 = vld [vmem:[#allocation5 + $0x24] sm:$0xf]
        %v328 = vld [vmem:[#allocation5 + $0x28] sm:$0xf]
        %v329 = vld [vmem:[#allocation5 + $0x2c] sm:$0xf]
        %v330 = vld [vmem:[#allocation5 + $0x30] sm:$0xf]
        %v331 = vld [vmem:[#allocation5 + $0x34] sm:$0xf]
        %v332 = vld [vmem:[#allocation5 + $0x38] sm:$0xf]
        %v333 = vld [vmem:[#allocation5 + $0x3c] sm:$0xf]
        %v334 = vld [vmem:[#allocation5 + $0x40] sm:$0xf]
        %v335 = vld [vmem:[#allocation5 + $0x44] sm:$0xf]
        %v336 = vld [vmem:[#allocation5 + $0x48] sm:$0xf]
        %v337 = vld [vmem:[#allocation5 + $0x4c] sm:$0xf]
        %v338 = vld [vmem:[#allocation5 + $0x50] sm:$0xf]
        %v339 = vld [vmem:[#allocation5 + $0x54] sm:$0xf]
        %v340 = vld [vmem:[#allocation5 + $0x58] sm:$0xf]
        %v341 = vld [vmem:[#allocation5 + $0x5c] sm:$0xf]
        %v366 = vunpack.c.l.b16 %v318
        %v367 = vunpack.c.l.b16 %v319
        %v368 = vunpack.c.l.b16 %v320
        %v369 = vunpack.c.l.b16 %v321
        %v370 = vunpack.c.l.b16 %v322
        %v371 = vunpack.c.l.b16 %v323
        %v372 = vunpack.c.l.b16 %v324
        %v373 = vunpack.c.l.b16 %v325
        %v374 = vunpack.c.l.b16 %v326
        %v375 = vunpack.c.l.b16 %v327
        %v376 = vunpack.c.l.b16 %v328
        %v377 = vunpack.c.l.b16 %v329
        %v378 = vunpack.c.l.b16 %v330
        %v379 = vunpack.c.l.b16 %v331
        %v380 = vunpack.c.l.b16 %v332
        %v381 = vunpack.c.l.b16 %v333
        %v382 = vunpack.c.l.b16 %v334
        %v383 = vunpack.c.l.b16 %v335
        %v384 = vunpack.c.l.b16 %v336
        %v385 = vunpack.c.l.b16 %v337
        %v386 = vunpack.c.l.b16 %v338
        %v387 = vunpack.c.l.b16 %v339
        %v388 = vunpack.c.l.b16 %v340
        %v389 = vunpack.c.l.b16 %v341
        %v390 = vpack.c.b16 %v367, %v366
        %v391 = vpack.c.b16 %v369, %v368
        %v392 = vpack.c.b16 %v371, %v370
        %v393 = vpack.c.b16 %v373, %v372
        %v394 = vpack.c.b16 %v375, %v374
        %v395 = vpack.c.b16 %v377, %v376
        %v396 = vpack.c.b16 %v379, %v378
        %v397 = vpack.c.b16 %v381, %v380
        %v398 = vpack.c.b16 %v383, %v382
        %v399 = vpack.c.b16 %v385, %v384
        %v400 = vpack.c.b16 %v387, %v386
        %v401 = vpack.c.b16 %v389, %v388
        %v415 = vsel %vm313, %v309, 0
        %417 = vmatprep.subr.bf16.mxu0 0
        %418 = vmatpush1.bf16.msra.mxu0 %v390
        %419 = vmatprep.subr.bf16.mxu0 0
        %420 = vmatpush1.bf16.msra.mxu0 %v391
        %421 = vmatprep.subr.bf16.mxu0 0
        %422 = vmatpush1.bf16.msra.mxu0 %v392
        %423 = vmatprep.subr.bf16.mxu0 0
        %424 = vmatpush1.bf16.msra.mxu0 %v393
        %425 = vmatprep.subr.bf16.mxu0 0
        %426 = vmatpush1.bf16.msra.mxu0 %v394
        %427 = vmatprep.subr.bf16.mxu0 0
        %428 = vmatpush1.bf16.msra.mxu0 %v395
        %429 = vmatprep.subr.bf16.mxu0 0
        %430 = vmatpush1.bf16.msra.mxu0 %v396
        %431 = vmatprep.subr.bf16.mxu0 0
        %432 = vmatpush1.bf16.msra.mxu0 %v397
        %433 = vmatprep.subr.bf16.mxu0 0
        %434 = vmatpush1.bf16.msra.mxu0 %v398
        %435 = vmatprep.subr.bf16.mxu0 0
        %436 = vmatpush1.bf16.msra.mxu0 %v399
        %437 = vmatprep.subr.bf16.mxu0 0
        %438 = vmatpush1.bf16.msra.mxu0 %v400
        %439 = vmatprep.subr.bf16.mxu0 0
        %440 = vmatpush1.bf16.msra.mxu0 %v401
        %441 = vmatprep.subr.bf16.mxu0 0
        %442 = vmatpush1.bf16.msra.mxu0 0
        %443 = vmatprep.subr.bf16.mxu0 0
        %444 = vmatpush1.bf16.msra.mxu0 0
        %445 = vmatprep.subr.bf16.mxu0 0
        %446 = vmatpush1.bf16.msra.mxu0 0
        %447 = vmatprep.subr.bf16.mxu0 0
        %448 = vmatpush1.bf16.msra.mxu0 0
        %449 = vmatprep.mubr.bf16.mxu0 %v415
        %450 = vmatmul.mubr.bf16.gmra.mrb[0].mxu0 %v316
        %v451 = vpop.f32.mrb[0].mxu0
        %v452 = vadd.f32 0.0, %v451
        %v453 = vpop.f32.mrb[0].mxu0
        %v454 = vpop.f32.mrb[0].mxu0
        %v455 = vadd.f32 0.0, %v454
        %v456 = vpop.f32.mrb[0].mxu0
        %457 = vdwg.mxu0
        %458 = vst [vmem:[%s230] sm:$0xff] %v452
        %459 = vst [vmem:[%s230 + $0x8] sm:$0xff] %v455
        %s460 = sand.u32 %s119, 1
        %s461 = scalar_lea.sflag [#allocation4], %s460
        %s462 = sand.u32 %s119, 1
        %s463 = smul.addr %s462, 16
        %s464 = scalar_lea.vmem [#allocation7], %s463
        // Predicated region
        $region45: #{tpu_custom_call.1} parent=35 // pred_check
          %p465 = pneg %p129
        $region46: #{tpu_custom_call.1} parent=35 // pred_check_branch
          %467 = sbr.rel (%p465) target = $region48
        $region47: #{tpu_custom_call.1} parent=35 // pred_region
          %s469 = ssub.s32 256, 256
          %470 = vsyncadd %s461, %s469
          %s471 = smul.addr %s22, 2
          %s472 = smul.addr %s471, 128
          %s473 = scalar_lea.hbm %s4, %s472
          %s474 = sshll.u32 %s464, 4
          %s475 = int_to_ptr.vmem [resolvable:$true] %s474
          %480 = dma.vmem_to_hbm [thread:$0]  %s475, 256, %s473, %s461, 128, 128, 8
        $region48: #{tpu_custom_call.1} parent=35 // pred_fallthru
          _
      $region36: #{tpu_custom_call.1} parent=5 // pred_fallthru
        _
      %p481 = scmp.le.s32.totalorder 2, %s17
      // Predicated region
      $region49: #{tpu_custom_call.1} parent=5 // pred_check
        %p482 = pneg %p481
      $region50: #{tpu_custom_call.1} parent=5 // pred_check_branch
        %484 = sbr.rel (%p482) target = $region52
      $region51: #{tpu_custom_call.1} parent=5 // pred_region
        %s485 = ssub.s32 %s17, 2
        // Predicated region
        $region53: #{tpu_custom_call.1} parent=51 // pred_check
          %p486 = pneg %p135
        $region54: #{tpu_custom_call.1} parent=51 // pred_check_branch
          %488 = sbr.rel (%p486) target = $region56
        $region55: #{tpu_custom_call.1} parent=51 // pred_region
          %s489 = sand.u32 %s120, 1
          %s490 = scalar_lea.sflag [#allocation4], %s489
          %s491 = sand.u32 %s120, 1
          %s492 = smul.addr %s491, 16
          %s493 = scalar_lea.vmem [#allocation7], %s492
          %494 = dma.done %s490, 256
        $region56: #{tpu_custom_call.1} parent=51 // pred_fallthru
          _
      $region52: #{tpu_custom_call.1} parent=5 // pred_fallthru
        _
    $region6: #{tpu_custom_call.1} parent=1 // loop_footer
      %s21 = sadd.s32 1, %s17
    $region7: #{tpu_custom_call.1} parent=1 // loop_footer_branch
      %16 = sbr.rel target = $region3
    $region8: #{tpu_custom_call.1} parent=1 // loop_exit
      _
    %495 = vsyncpa [#allocation3], 1
    %s496 = scalar_lea.sflag [#allocation3], 1
    %497 = vsyncpa %s496, 1
    %498 = vsyncpa [#allocation6], 1
    %499 = vsyncpa [#allocation4], 1
    %s500 = scalar_lea.sflag [#allocation4], 1
    %501 = vsyncpa %s500, 1

</llo_original>
